<compile_context>
chip_gen: v7x
topology: tpu7x:2x2x1
jax: 0.10.0
libtpu: 0.0.40
codegen_flags: <defaults>
</compile_context>

<pallas_src>
import functools

import jax
import jax.numpy as jnp
from jax.experimental import pallas as pl
from jax.experimental.pallas import tpu as pltpu

_LANES = 128
_SUBLANES = 8
_NUM_CORES = 2  # v7x has 2 TensorCores; harmless (serial) on v5e/v6e.


def _round_up(a, b):
    return ((a + b - 1) // b) * b


def _valid_pixels_kernel(x_ref, acc_ref, *, block_rows, rows,
                         blocks_per_core, need_mask):
    j = pl.program_id(1)

    @pl.when(j == 0)
    def _():
        acc_ref[...] = jnp.zeros_like(acc_ref)

    x = x_ref[...].astype(jnp.float32)                 # cast in-register only
    # relu(x-1) + relu(-x) == relu(max(x-1, -x)) (never both positive).
    penalty = jnp.maximum(jnp.maximum(x - 1.0, -x), 0.0)

    if need_mask:
        p = pl.program_id(0)
        base_row = (p * blocks_per_core + j) * block_rows
        row_ids = base_row + jax.lax.broadcasted_iota(
            jnp.int32, (block_rows, _LANES), 0)
        # Select (not multiply): out-of-range lanes may hold NaN/Inf garbage.
        penalty = jnp.where(row_ids < rows, penalty, 0.0)

    # Partial-sum tree: (block_rows, 128) -> (block_rows/8, 8, 128), sum over
    # the leading axis = pure vreg-wise VPU adds, no cross-lane movement.
    p3 = penalty.reshape(block_rows // _SUBLANES, _SUBLANES, _LANES)
    acc_ref[...] += jnp.sum(p3, axis=0)[None]          # (1, 8, 128) resident


def valid_pixels_loss(x, strength, *, max_block_rows=8192):
    """Mirrors ValidPixelsLoss.forward: returns (input_unchanged, loss_scalar)."""
    n = x.size

    if n % _LANES == 0:
        # Free, layout-preserving reshape: no extra HBM traffic, native dtype.
        slab = jnp.reshape(x, (n // _LANES, _LANES))
    else:
        # Rare ragged case: pad the tail (zeros contribute exactly 0 penalty).
        # This costs one extra HBM copy; common image shapes avoid it.
        slab = jnp.pad(jnp.ravel(x), (0, (-n) % _LANES)).reshape(-1, _LANES)
    rows = slab.shape[0]

    block_rows = min(max_block_rows, _round_up(rows, _SUBLANES))
    num_blocks = pl.cdiv(rows, block_rows)
    blocks_per_core = pl.cdiv(num_blocks, _NUM_CORES)
    extra_blocks = _NUM_CORES * blocks_per_core > num_blocks
    need_mask = _NUM_CORES * blocks_per_core * block_rows != rows

    def x_index_map(p, j):
        blk = p * blocks_per_core + j
        if extra_blocks:
            blk = jnp.minimum(blk, num_blocks - 1)     # keep DMAs in bounds
        return (blk, 0)

    partials = pl.pallas_call(
        functools.partial(_valid_pixels_kernel,
                          block_rows=block_rows, rows=rows,
                          blocks_per_core=blocks_per_core,
                          need_mask=need_mask),
        out_shape=jax.ShapeDtypeStruct((_NUM_CORES, _SUBLANES, _LANES),
                                       jnp.float32),
        grid=(_NUM_CORES, blocks_per_core),
        in_specs=[pl.BlockSpec((block_rows, _LANES), x_index_map)],
        out_specs=pl.BlockSpec((1, _SUBLANES, _LANES),
                               lambda p, j: (p, 0, 0)),   # per-core accumulator
        compiler_params=pltpu.CompilerParams(
            dimension_semantics=("parallel", "arbitrary")),
    )(slab)

    # Cross-lane reduce + strength/numel scaling on 2x8x128 floats: free in the
    # wrapper, and the kernel never retraces when `strength` changes.
    loss = (jnp.float32(strength) / jnp.float32(n)) * jnp.sum(partials)
    # forward() returns the input unchanged; loss is exposed as a second output
    # instead of a module attribute.
    return x, loss


if __name__ == "__main__":
    key = jax.random.PRNGKey(0)
    x = jax.random.uniform(key, (2, 4, 16, 16), jnp.float32,
                           minval=-0.5, maxval=1.5)
    strength = 2.5

    out, loss = valid_pixels_loss(x, strength)
    jax.block_until_ready(out)
    jax.block_until_ready(loss)

    ref = strength / x.size * (jnp.sum(jax.nn.relu(x - 1.0))
                               + jnp.sum(jax.nn.relu(-x)))
    assert out.shape == x.shape
    assert bool(jnp.allclose(out, x))
    assert bool(jnp.allclose(loss, ref, rtol=1e-5, atol=1e-6)), (loss, ref)
    print("KERNEL_OK")
</pallas_src>

<mosaic_0001>
module attributes {stable_mosaic.version = 11 : i64} {
  func.func @_valid_pixels_kernel(%arg0: i32, %arg1: i32, %arg2: memref<16x128xf32, #tpu.memory_space<vmem>>, %arg3: memref<1x8x128xf32, #tpu.memory_space<vmem>>) attributes {dimension_semantics = [#tpu.dimension_semantics<parallel>, #tpu.dimension_semantics<arbitrary>], iteration_bounds = array<i64: 2, 1>, scalar_prefetch = 0 : i64, scratch_operands = 0 : i64, tpu.core_type = #tpu.core_type<tc>, window_params = [{transform_indices = @transform_0, window_bounds = array<i64: 16, 128>}, {transform_indices = @transform_1, window_bounds = array<i64: 1, 8, 128>}]} {
    %c0_i32 = arith.constant 0 : i32
    %0 = arith.cmpi eq, %arg1, %c0_i32 : i32
    %1 = arith.extui %0 : i1 to i32
    %c0_i32_0 = arith.constant 0 : i32
    %2 = arith.cmpi ne, %1, %c0_i32_0 : i32
    scf.if %2 {
      %cst_13 = arith.constant 0.000000e+00 : f32
      %27 = vector.broadcast %cst_13 : f32 to vector<1x8x128xf32>
      %c0_14 = arith.constant 0 : index
      %c0_15 = arith.constant 0 : index
      %c0_16 = arith.constant 0 : index
      %28 = vector.load %arg3[%c0_14, %c0_15, %c0_16] : memref<1x8x128xf32, #tpu.memory_space<vmem>>, vector<1x8x128xf32>
      tpu.vector_store %arg3[%c0_14, %c0_15, %c0_16], %27 {strides = array<i32>} : memref<1x8x128xf32, #tpu.memory_space<vmem>>, vector<1x8x128xf32>,
    } else {
    }
    %c0 = arith.constant 0 : index
    %c0_1 = arith.constant 0 : index
    %3 = vector.load %arg2[%c0, %c0_1] : memref<16x128xf32, #tpu.memory_space<vmem>>, vector<16x128xf32>
    %cst = arith.constant 1.000000e+00 : f32
    %4 = vector.broadcast %cst : f32 to vector<16x128xf32>
    %5 = arith.subf %3, %4 : vector<16x128xf32>
    %cst_2 = arith.constant 0.000000e+00 : f32
    %6 = vector.broadcast %cst_2 : f32 to vector<16x128xf32>
    %7 = arith.subf %6, %3 : vector<16x128xf32>
    %8 = arith.maximumf %5, %7 : vector<16x128xf32>
    %cst_3 = arith.constant 0.000000e+00 : f32
    %9 = vector.broadcast %cst_3 : f32 to vector<16x128xf32>
    %10 = arith.maximumf %8, %9 : vector<16x128xf32>
    %c1_i32 = arith.constant 1 : i32
    %11 = arith.muli %arg0, %c1_i32 : i32
    %12 = arith.addi %11, %arg1 : i32
    %c16_i32 = arith.constant 16 : i32
    %13 = arith.muli %12, %c16_i32 : i32
    %14 = tpu.iota {dimensions = array<i32: 0>} : vector<16x128xi32>
    %15 = vector.broadcast %13 : i32 to vector<16x128xi32>
    %16 = arith.addi %15, %14 : vector<16x128xi32>
    %c16_i32_4 = arith.constant 16 : i32
    %17 = vector.broadcast %c16_i32_4 : i32 to vector<16x128xi32>
    %18 = arith.cmpi slt, %16, %17 : vector<16x128xi32>
    %cst_5 = arith.constant 0.000000e+00 : f32
    %19 = vector.broadcast %cst_5 : f32 to vector<16x128xf32>
    %20 = arith.select %18, %10, %19 : vector<16x128xi1>, vector<16x128xf32>
    %21 = vector.shape_cast %20 : vector<16x128xf32> to vector<2x8x128xf32>
    %c0_6 = arith.constant 0 : index
    %c0_7 = arith.constant 0 : index
    %c0_8 = arith.constant 0 : index
    %22 = vector.load %arg3[%c0_6, %c0_7, %c0_8] : memref<1x8x128xf32, #tpu.memory_space<vmem>>, vector<1x8x128xf32>
    %cst_9 = arith.constant dense<0.000000e+00> : vector<8x128xf32>
    %23 = vector.multi_reduction <add>, %21, %cst_9 [0] : vector<2x8x128xf32> to vector<8x128xf32>
    %24 = vector.shape_cast %23 : vector<8x128xf32> to vector<1x8x128xf32>
    %25 = arith.addf %22, %24 : vector<1x8x128xf32>
    %c0_10 = arith.constant 0 : index
    %c0_11 = arith.constant 0 : index
    %c0_12 = arith.constant 0 : index
    %26 = vector.load %arg3[%c0_10, %c0_11, %c0_12] : memref<1x8x128xf32, #tpu.memory_space<vmem>>, vector<1x8x128xf32>
    tpu.vector_store %arg3[%c0_10, %c0_11, %c0_12], %25 {strides = array<i32>} : memref<1x8x128xf32, #tpu.memory_space<vmem>>, vector<1x8x128xf32>,
    return
  }
  func.func @transform_0(%arg0: i32, %arg1: i32) -> (i32, i32) {
    %c1_i32 = arith.constant 1 : i32
    %0 = arith.muli %arg0, %c1_i32 : i32
    %1 = arith.addi %0, %arg1 : i32
    %c0_i32 = arith.constant 0 : i32
    %2 = arith.minsi %1, %c0_i32 : i32
    %c0_i32_0 = arith.constant 0 : i32
    %c0_i32_1 = arith.constant 0 : i32
    return %2, %c0_i32_0 : i32, i32
  }
  func.func @transform_1(%arg0: i32, %arg1: i32) -> (i32, i32, i32) {
    %c0_i32 = arith.constant 0 : i32
    %c0_i32_0 = arith.constant 0 : i32
    %c0_i32_1 = arith.constant 0 : i32
    return %arg0, %c0_i32, %c0_i32_0 : i32, i32, i32
  }
}

</mosaic_0001>

<llo_original>
// kernel: tpu_custom_call.1
$region0: #{tpu_custom_call.1}
  #allocation0 [shape = 'u32[]', space=smem, size = 0x4, offset = 0x4, fixed_abs, tag = 'smem constant byte address 0x4 - core index']
  #allocation1 [shape = 'u32[144,128]{1,0:T(1,128)}', space=vmem, size = 0x12000, scoped, tag = 'internal scratch']
  %s0 = inlined_call_operand.hbm [shape: f32[16,128], index: 0, kind: input, shape index: {}]
  %s1 = inlined_call_operand.hbm [shape: f32[2,8,128], index: 1, kind: output, shape index: {}]
  %s2 = sld [smem:[#allocation0]]
  $region45: #{tpu_custom_call.1} parent=0
    _
  %s4 = ssub.s32 1, %s2
  %s5 = scalar_select 0, %s4, %s2
  $region1: #{tpu_custom_call.1} parent=0
    #allocation2 [shape = 'u8[16384]{0}', space=vmem, size = 0x4000, scoped, tag = 'input window, operand 0']
    #allocation3 [shape = 's32[2]{0}', space=sflag, size = 0x8, scoped, tag = 'scoped memory for tpu_custom_call.1']
    #allocation4 [shape = 's32[2]{0}', space=sflag, size = 0x8, scoped, tag = 'scoped memory for tpu_custom_call.1']
    #allocation5 [shape = 'u8[8192]{0}', space=vmem, size = 0x2000, scoped, tag = 'output window, operand 0']
    %6 = vsyncpa [#allocation3], 0
    %s7 = scalar_lea.sflag [#allocation3], 1
    %8 = vsyncpa %s7, 0
    %9 = vsyncpa [#allocation4], 0
    %s10 = scalar_lea.sflag [#allocation4], 1
    %11 = vsyncpa %s10, 0
    loop: start=0, step=1, limit=4
    $region2: #{tpu_custom_call.1} parent=1 // loop_pre_header
      _
    $region3: #{tpu_custom_call.1} parent=1 // loop_header
      %s13 = sphi 0, %s17
      %p14 = scmp.ge.s32.totalorder %s13, 4
      %s20 = sphi 0, %s32
      %s21 = sphi 0, %s28
      %s22 = sphi 0, %s20
      %s23 = sphi 0, %s21
      %s24 = sphi 0, %s22
      %s25 = sphi 0, %s23
      %s41 = sphi 0, %s43
      %s44 = sphi 0, %s41
      %s45 = sphi 0, %s44
      %s61 = sphi 0, %s45
      %s67 = sphi 0, %s69
      %s70 = sphi 0, %s67
      %s71 = sphi 0, %s70
      %s87 = sphi 0, %s71
    $region4: #{tpu_custom_call.1} parent=1 // loop_header_branch
      %16 = sbr.rel (%p14) target = $region8
    $region5: #{tpu_custom_call.1} parent=1 // loop_body
      %s18 = ssub.s32 %s13, 1
      %s19 = ssub.s32 %s13, 2
      %s26 = sadd.s32 1, %s21
      %p27 = scmp.ge.s32.totalorder %s26, 1
      %s28 = scalar_select %p27, 0, %s26
      %s29 = sadd.s32 1, %s20
      %s30 = scalar_select %p27, %s29, %s20
      %p31 = scmp.ge.s32.totalorder %s30, 2
      %s32 = scalar_select %p31, 0, %s30
      %s33 = sadd.s32 %s20, %s21
      %p34 = scmp.lt.s32.totalorder %s33, 0
      %s35 = scalar_select %p34, %s33, 0
      %s36 = sadd.s32 %s32, %s28
      %p37 = scmp.lt.s32.totalorder %s36, 0
      %s38 = scalar_select %p37, %s36, 0
      %s39 = ssub.s32 %s35, %s38
      %p40 = scmp.eq.s32.totalorder %s39, 0
      %s42 = sadd.s32 %s41, 1
      %s43 = scalar_select %p40, %s41, %s42
      %p46 = pneg %p40
      %p47 = scmp.eq.s32.totalorder %s13, 1
      %p48 = por %p46, %p47
      %p49 = scmp.ne.s32.totalorder %s41, %s44
      %p50 = scmp.eq.s32.totalorder %s13, 0
      %p51 = por %p49, %p50
      %p52 = scmp.ne.s32.totalorder %s41, %s44
      %p53 = scmp.eq.s32.totalorder %s18, 1
      %p54 = por %p52, %p53
      %p55 = scmp.ne.s32.totalorder %s44, %s45
      %p56 = scmp.eq.s32.totalorder %s18, 0
      %p57 = por %p55, %p56
      %p58 = scmp.ne.s32.totalorder %s44, %s45
      %p59 = scmp.eq.s32.totalorder %s19, 1
      %p60 = por %p58, %p59
      %p62 = scmp.ne.s32.totalorder %s45, %s61
      %p63 = scmp.eq.s32.totalorder %s19, 0
      %p64 = por %p62, %p63
      %s65 = ssub.s32 %s20, %s32
      %p66 = scmp.eq.s32.totalorder %s65, 0
      %s68 = sadd.s32 %s67, 1
      %s69 = scalar_select %p66, %s67, %s68
      %p72 = pneg %p66
      %p73 = scmp.eq.s32.totalorder %s13, 1
      %p74 = por %p72, %p73
      %p75 = scmp.ne.s32.totalorder %s67, %s70
      %p76 = scmp.eq.s32.totalorder %s13, 0
      %p77 = por %p75, %p76
      %p78 = scmp.ne.s32.totalorder %s67, %s70
      %p79 = scmp.eq.s32.totalorder %s18, 1
      %p80 = por %p78, %p79
      %p81 = scmp.ne.s32.totalorder %s70, %s71
      %p82 = scmp.eq.s32.totalorder %s18, 0
      %p83 = por %p81, %p82
      %p84 = scmp.ne.s32.totalorder %s70, %s71
      %p85 = scmp.eq.s32.totalorder %s19, 1
      %p86 = por %p84, %p85
      %p88 = scmp.ne.s32.totalorder %s71, %s87
      %p89 = scmp.eq.s32.totalorder %s19, 0
      %p90 = por %p88, %p89
      %p91 = scmp.le.s32.totalorder 1, %s13
      %p92 = scmp.lt.s32.totalorder %s13, 3
      %p93 = pnand %p91, %p92
      %p94 = pneg %p93
      // Predicated region
      $region9: #{tpu_custom_call.1} parent=5 // pred_check
        _
      $region10: #{tpu_custom_call.1} parent=5 // pred_check_branch
        %96 = sbr.rel (%p93) target = $region12
      $region11: #{tpu_custom_call.1} parent=5 // pred_region
        %s97 = ssub.s32 %s13, 1
      $region12: #{tpu_custom_call.1} parent=5 // pred_fallthru
        _
      %p98 = scmp.lt.s32.totalorder %s13, 2
      // Predicated region
      $region13: #{tpu_custom_call.1} parent=5 // pred_check
        %p99 = pneg %p98
      $region14: #{tpu_custom_call.1} parent=5 // pred_check_branch
        %101 = sbr.rel (%p99) target = $region16
      $region15: #{tpu_custom_call.1} parent=5 // pred_region
        // Predicated region
        $region17: #{tpu_custom_call.1} parent=15 // pred_check
          %p102 = pneg %p51
        $region18: #{tpu_custom_call.1} parent=15 // pred_check_branch
          %104 = sbr.rel (%p102) target = $region20
        $region19: #{tpu_custom_call.1} parent=15 // pred_region
          %s105 = sand.u32 %s41, 1
          %s106 = scalar_lea.sflag [#allocation3], %s105
          %s107 = sand.u32 %s41, 1
          %s108 = smul.addr %s107, 16
          %s109 = scalar_lea.vmem [#allocation2], %s108
          %s110 = sadd.s32 %s20, %s21
          %p111 = scmp.lt.s32.totalorder %s110, 0
          %s112 = scalar_select %p111, %s110, 0
          %s113 = smul.u32 2, %s112
          %s115 = ssub.s32 256, 256
          %116 = vsyncadd %s106, %s115
          %s117 = smul.addr %s113, 128
          %s118 = scalar_lea.hbm %s0, %s117
          %s119 = sshll.u32 %s109, 4
          %s120 = int_to_ptr.vmem [resolvable:$true] %s119
          %125 = dma.hbm_to_vmem [thread:$0]  %s118, 256, %s120, %s106, 128, 128, 8
        $region20: #{tpu_custom_call.1} parent=15 // pred_fallthru
          _
      $region16: #{tpu_custom_call.1} parent=5 // pred_fallthru
        _
      %p126 = scmp.le.s32.totalorder 1, %s13
      %p127 = scmp.lt.s32.totalorder %s13, 3
      %p128 = pnand %p126, %p127
      %p129 = pneg %p128
      // Predicated region
      $region21: #{tpu_custom_call.1} parent=5 // pred_check
        _
      $region22: #{tpu_custom_call.1} parent=5 // pred_check_branch
        %131 = sbr.rel (%p128) target = $region24
      $region23: #{tpu_custom_call.1} parent=5 // pred_region
        %s132 = ssub.s32 %s13, 1
        %s133 = sand.u32 %s44, 1
        %s134 = scalar_lea.sflag [#allocation3], %s133
        %s135 = sand.u32 %s44, 1
        %s136 = smul.addr %s135, 16
        %s137 = scalar_lea.vmem [#allocation2], %s136
        // Predicated region
        $region25: #{tpu_custom_call.1} parent=23 // pred_check
          %p138 = pneg %p57
        $region26: #{tpu_custom_call.1} parent=23 // pred_check_branch
          %140 = sbr.rel (%p138) target = $region28
        $region27: #{tpu_custom_call.1} parent=23 // pred_region
          %141 = dma.done %s134, 256
        $region28: #{tpu_custom_call.1} parent=23 // pred_fallthru
          _
        %s142 = sand.u32 %s44, 1
        %s143 = scalar_lea.sflag [#allocation3], %s142
        %s144 = sand.u32 %s44, 1
        %s145 = smul.addr %s144, 16
        %s146 = scalar_lea.vmem [#allocation2], %s145
        %p147 = pneg %p57
        %p148 = pneg %p54
        %p149 = pneg %p83
        %p150 = pneg %p80
        %s151 = sand.u32 %s70, 1
        %s152 = scalar_lea.sflag [#allocation4], %s151
        %s153 = sand.u32 %s70, 1
        %s154 = smul.addr %s153, 8
        %s155 = scalar_lea.vmem [#allocation5], %s154
        %s156 = sadd.s32 %s22, %s23
        %p157 = scmp.lt.s32.totalorder %s156, 0
        %s158 = scalar_select %p157, %s156, 0
        %s159 = smul.u32 2, %s158
        %p160 = scmp.eq.s32.totalorder %s23, 0
        // Predicated region
        $region29: #{tpu_custom_call.1} parent=23 // pred_check
          %p161 = pneg %p160
        $region30: #{tpu_custom_call.1} parent=23 // pred_check_branch
          %163 = sbr.rel (%p161) target = $region32
        $region31: #{tpu_custom_call.1} parent=23 // pred_region
          %164 = vst [vmem:[%s155] sm:$0xff] 0.0
        $region32: #{tpu_custom_call.1} parent=23 // pred_fallthru
          _
        %v165 = vld [vmem:[%s137] sm:$0xff]
        %v166 = vld [vmem:[%s137 + $0x8] sm:$0xff]
        %v167 = vsub.f32 %v165, 1.0
        %v168 = vsub.f32 %v166, 1.0
        %v169 = vsub.f32 0.0, %v165
        %v170 = vsub.f32 0.0, %v166
        %v171 = vmax.f32 %v167, %v169
        %v172 = vmax.f32 %v168, %v170
        %v173 = vmax.f32 %v171, 0.0
        %v174 = vmax.f32 %v172, 0.0
        %s175 = sadd.s32 %s22, %s23
        %s176 = smul.u32 %s175, 16
        %v177 = vlaneseq
        %v178 = vshrl.u32 %v177, 7
        %v179 = vadd.s32 %v178, 8
        %v180 = vstv %s176
        %v181 = vadd.s32 %v180, %v178
        %v182 = vadd.s32 %v180, %v179
        %vm183 = vcmp.lt.s32.totalorder %v181, 16
        %vm184 = vcmp.lt.s32.totalorder %v182, 16
        %v185 = vsel %vm183, %v173, 0.0
        %v186 = vsel %vm184, %v174, 0.0
        %v187 = vld [vmem:[%s155] sm:$0xff]
        %v188 = vadd.f32 %v185, %v186
        %v189 = vadd.f32 %v187, %v188
        %190 = vst [vmem:[%s155] sm:$0xff] %v189
        %s191 = sand.u32 %s70, 1
        %s192 = scalar_lea.sflag [#allocation4], %s191
        %s193 = sand.u32 %s70, 1
        %s194 = smul.addr %s193, 8
        %s195 = scalar_lea.vmem [#allocation5], %s194
        // Predicated region
        $region33: #{tpu_custom_call.1} parent=23 // pred_check
          %p196 = pneg %p80
        $region34: #{tpu_custom_call.1} parent=23 // pred_check_branch
          %198 = sbr.rel (%p196) target = $region36
        $region35: #{tpu_custom_call.1} parent=23 // pred_region
          %s200 = ssub.s32 128, 128
          %201 = vsyncadd %s192, %s200
          %s202 = smul.addr %s22, 128
          %s203 = scalar_lea.hbm %s1, %s202
          %s205 = sshll.u32 %s195, 4
          %s206 = int_to_ptr.vmem [resolvable:$true] %s205
          %208 = dma.vmem_to_hbm [thread:$0]  %s206, 128, %s203, %s192
        $region36: #{tpu_custom_call.1} parent=23 // pred_fallthru
          _
      $region24: #{tpu_custom_call.1} parent=5 // pred_fallthru
        _
      %p209 = scmp.le.s32.totalorder 2, %s13
      // Predicated region
      $region37: #{tpu_custom_call.1} parent=5 // pred_check
        %p210 = pneg %p209
      $region38: #{tpu_custom_call.1} parent=5 // pred_check_branch
        %212 = sbr.rel (%p210) target = $region40
      $region39: #{tpu_custom_call.1} parent=5 // pred_region
        %s213 = ssub.s32 %s13, 2
        // Predicated region
        $region41: #{tpu_custom_call.1} parent=39 // pred_check
          %p214 = pneg %p86
        $region42: #{tpu_custom_call.1} parent=39 // pred_check_branch
          %216 = sbr.rel (%p214) target = $region44
        $region43: #{tpu_custom_call.1} parent=39 // pred_region
          %s217 = sand.u32 %s71, 1
          %s218 = scalar_lea.sflag [#allocation4], %s217
          %s219 = sand.u32 %s71, 1
          %s220 = smul.addr %s219, 8
          %s221 = scalar_lea.vmem [#allocation5], %s220
          %222 = dma.done %s218, 128
        $region44: #{tpu_custom_call.1} parent=39 // pred_fallthru
          _
      $region40: #{tpu_custom_call.1} parent=5 // pred_fallthru
        _
    $region6: #{tpu_custom_call.1} parent=1 // loop_footer
      %s17 = sadd.s32 1, %s13
    $region7: #{tpu_custom_call.1} parent=1 // loop_footer_branch
      %12 = sbr.rel target = $region3
    $region8: #{tpu_custom_call.1} parent=1 // loop_exit
      _
    %223 = vsyncpa [#allocation3], 1
    %s224 = scalar_lea.sflag [#allocation3], 1
    %225 = vsyncpa %s224, 1
    %226 = vsyncpa [#allocation4], 1
    %s227 = scalar_lea.sflag [#allocation4], 1
    %228 = vsyncpa %s227, 1

</llo_original>
